<compile_context>
chip_gen: v6e
topology: v6e:2x2x1
jax: 0.10.0
libtpu: 0.0.40
codegen_flags: <defaults>
</compile_context>

<pallas_src>
import jax
import jax.numpy as jnp
from jax import lax
from jax.experimental import pallas as pl
from jax.experimental.pallas import tpu as pltpu

COEFFICIENT = 0.85
_N_CORES = 2  # leading "parallel" grid axis (megacore split on v7x)


def _ce_partial_kernel(logits_ref, tgt_ref, sum_ref, cnt_ref):
    """Accumulates per-core CE partial sum / valid count over row tiles."""
    i = pl.program_id(1)  # reduction ("arbitrary") axis

    @pl.when(i == 0)
    def _init():
        sum_ref[...] = jnp.zeros_like(sum_ref)
        cnt_ref[...] = jnp.zeros_like(cnt_ref)

    x = logits_ref[...]                        # (TM, V), native dtype
    tgt = tgt_ref[...]                         # (TM, 1), int32
    tm, vocab = x.shape

    # Row max and target-logit gather in the native dtype (bf16 vregs hold 2x
    # the elements on v6e/v7x); only the (TM, 1) results are cast to f32.
    # Gather from the RAW logits so `shifted` below is single-consumer.
    col_idx = lax.broadcasted_iota(jnp.int32, (tm, vocab), 1)
    tgt_logit = jnp.sum(jnp.where(col_idx == tgt, x, jnp.zeros_like(x)),
                        axis=-1, keepdims=True).astype(jnp.float32)
    row_max = jnp.max(x, axis=-1, keepdims=True).astype(jnp.float32)

    # exp / sumexp in f32 (v5e-safe); sub+exp+sum fuse into one streaming pass.
    shifted = x.astype(jnp.float32) - row_max
    sumexp = jnp.sum(jnp.exp(shifted), axis=-1, keepdims=True)   # (TM, 1)

    per_row_ce = jnp.log(sumexp) + row_max - tgt_logit           # (TM, 1)
    valid = (tgt != 0).astype(jnp.float32)                       # ignore_index

    sum_ref[...] += jnp.sum(per_row_ce * valid, axis=0, keepdims=True)
    cnt_ref[...] += jnp.sum(valid, axis=0, keepdims=True)


def _round_up(x, m):
    return ((x + m - 1) // m) * m


def loss_fn(correction_outputs, correction_targets,
            detection_outputs, detection_targets,
            coefficient=COEFFICIENT):
    B, S, V = correction_outputs.shape
    N = B * S

    # Stream logits in their native dtype (bf16 stays bf16); no wrapper cast.
    logits = correction_outputs.reshape(N, V)
    targets = correction_targets.reshape(N, 1).astype(jnp.int32)

    elem_bytes = jnp.dtype(logits.dtype).itemsize

    # Generation-aware VMEM capacity (v5e/v6e: 128 MiB, v7x: 64 MiB per TC).
    try:
        vmem_cap = int(pltpu.get_tpu_info().vmem_capacity_bytes)
    except Exception:
        vmem_cap = 64 * 1024 * 1024  # conservative fallback

    # Row-tile size: double-buffered native tile + ~2x (TM,V) f32 temporaries
    # + lane-padded targets must fit in ~70% of VMEM; single tile <= 16 MiB.
    budget = int(0.70 * vmem_cap)
    bytes_per_row = V * (2 * elem_bytes + 8) + 2 * 128 * 4
    tm = budget // max(1, bytes_per_row)
    tm = min(tm, (16 * 1024 * 1024) // max(1, V * elem_bytes))

    # Packed-sublane multiple for the streamed dtype (8 f32 / 16 bf16 / 32 i8).
    packing = max(8, (4 // max(1, elem_bytes)) * 8)
    tm = max(packing, (tm // packing) * packing)
    rows_per_core = -(-N // _N_CORES)
    tm = min(tm, _round_up(rows_per_core, packing))

    tiles_per_core = -(-N // (_N_CORES * tm))
    n_pad = _N_CORES * tiles_per_core * tm
    if n_pad != N:
        # Padded rows carry target == 0 (ignore_index) -> never contribute.
        logits = jnp.pad(logits, ((0, n_pad - N), (0, 0)))
        targets = jnp.pad(targets, ((0, n_pad - N), (0, 0)))

    needed = (2 * tm * V * elem_bytes        # double-buffered logits tiles
              + 2 * tm * V * 4               # in-kernel f32 temporaries (est.)
              + 2 * tm * 128 * 4             # targets tiles (lane padded)
              + 2 * 1024 * 1024)             # output / misc headroom
    vmem_limit = int(min(0.9 * vmem_cap, max(24 * 1024 * 1024, needed)))

    cost = pl.CostEstimate(
        flops=int(6 * n_pad * V),
        transcendentals=int(n_pad * V + n_pad),
        bytes_accessed=int(n_pad * V * elem_bytes + n_pad * 4 + _N_CORES * 8))

    ce_sum, ce_cnt = pl.pallas_call(
        _ce_partial_kernel,
        out_shape=(jax.ShapeDtypeStruct((_N_CORES, 1, 1), jnp.float32),
                   jax.ShapeDtypeStruct((_N_CORES, 1, 1), jnp.float32)),
        grid=(_N_CORES, tiles_per_core),
        in_specs=[
            pl.BlockSpec((tm, V), lambda c, i: (c * tiles_per_core + i, 0)),
            pl.BlockSpec((tm, 1), lambda c, i: (c * tiles_per_core + i, 0)),
        ],
        out_specs=[
            pl.BlockSpec((None, 1, 1), lambda c, i: (c, 0, 0)),
            pl.BlockSpec((None, 1, 1), lambda c, i: (c, 0, 0)),
        ],
        compiler_params=pltpu.CompilerParams(
            dimension_semantics=("parallel", "arbitrary"),
            vmem_limit_bytes=vmem_limit),
        cost_estimate=cost,
    )(logits, targets)

    # Per-core partials combined + BCE + weighted sum in plain JAX (trivial
    # for XLA; keeps the streamed kernel free of detection blocks/finalize).
    ce = jnp.sum(ce_sum) / jnp.sum(ce_cnt)     # NaN if no valid targets (== PyTorch)

    p = detection_outputs.astype(jnp.float32)
    t = detection_targets.astype(jnp.float32)
    log_p = jnp.maximum(jnp.log(p), -100.0)        # PyTorch BCELoss log clamp
    log_1mp = jnp.maximum(jnp.log1p(-p), -100.0)
    bce = -jnp.mean(t * log_p + (1.0 - t) * log_1mp)

    coefficient = jnp.float32(coefficient)
    return coefficient * ce + (1.0 - coefficient) * bce


def _reference(correction_outputs, correction_targets,
               detection_outputs, detection_targets,
               coefficient=COEFFICIENT):
    B, S, V = correction_outputs.shape
    logits = correction_outputs.reshape(-1, V).astype(jnp.float32)
    tgt = correction_targets.reshape(-1)
    logp = jax.nn.log_softmax(logits, axis=-1)
    per_row = -jnp.take_along_axis(logp, tgt[:, None], axis=-1)[:, 0]
    valid = (tgt != 0).astype(jnp.float32)
    ce = jnp.sum(per_row * valid) / jnp.sum(valid)
    p = detection_outputs.astype(jnp.float32)
    t = detection_targets.astype(jnp.float32)
    log_p = jnp.maximum(jnp.log(p), -100.0)
    log_1mp = jnp.maximum(jnp.log1p(-p), -100.0)
    bce = -jnp.mean(t * log_p + (1.0 - t) * log_1mp)
    return coefficient * ce + (1.0 - coefficient) * bce


if __name__ == "__main__":
    key = jax.random.PRNGKey(0)
    k1, k2, k3, k4 = jax.random.split(key, 4)

    B, S, V = 2, 8, 32
    correction_outputs = jax.random.normal(k1, (B, S, V), dtype=jnp.float32)
    # Include some 0s so ignore_index is exercised, but not all zeros.
    correction_targets = jax.random.randint(k2, (B, S), 0, V, dtype=jnp.int32)
    detection_outputs = jax.nn.sigmoid(
        jax.random.normal(k3, (B, S), dtype=jnp.float32))
    detection_targets = jax.random.bernoulli(k4, 0.5, (B, S)).astype(jnp.float32)

    result = loss_fn(correction_outputs, correction_targets,
                     detection_outputs, detection_targets)
    jax.block_until_ready(result)

    ref = _reference(correction_outputs, correction_targets,
                     detection_outputs, detection_targets)
    assert jnp.allclose(result, ref, rtol=1e-5, atol=1e-5), (result, ref)

    print("KERNEL_OK")
</pallas_src>

<mosaic_0001>
module attributes {stable_mosaic.version = 11 : i64} {
  func.func @_ce_partial_kernel(%arg0: i32, %arg1: i32, %arg2: memref<8x32xf32, #tpu.memory_space<vmem>>, %arg3: memref<8x1xi32, #tpu.memory_space<vmem>>, %arg4: memref<1x1x1xf32, #tpu.memory_space<vmem>>, %arg5: memref<1x1x1xf32, #tpu.memory_space<vmem>>) attributes {dimension_semantics = [#tpu.dimension_semantics<parallel>, #tpu.dimension_semantics<arbitrary>], iteration_bounds = array<i64: 2, 1>, scalar_prefetch = 0 : i64, scratch_operands = 0 : i64, tpu.core_type = #tpu.core_type<tc>, window_params = [{transform_indices = @transform_0, window_bounds = array<i64: 8, 32>}, {transform_indices = @transform_1, window_bounds = array<i64: 8, 1>}, {transform_indices = @transform_2, window_bounds = array<i64: 1, 1, 1>}, {transform_indices = @transform_3, window_bounds = array<i64: 1, 1, 1>}]} {
    %c0_i32 = arith.constant 0 : i32
    %0 = arith.cmpi eq, %arg1, %c0_i32 : i32
    %1 = arith.extui %0 : i1 to i32
    %c0_i32_0 = arith.constant 0 : i32
    %2 = arith.cmpi ne, %1, %c0_i32_0 : i32
    scf.if %2 {
      %cst_22 = arith.constant 0.000000e+00 : f32
      %43 = vector.broadcast %cst_22 : f32 to vector<1x1xf32>
      %c0_23 = arith.constant 0 : index
      %c0_24 = arith.constant 0 : index
      %c0_25 = arith.constant 0 : index
      %44 = vector.load %arg4[%c0_23, %c0_24, %c0_25] : memref<1x1x1xf32, #tpu.memory_space<vmem>>, vector<1x1x1xf32>
      %45 = vector.shape_cast %44 : vector<1x1x1xf32> to vector<1x1xf32>
      %46 = vector.shape_cast %43 : vector<1x1xf32> to vector<1x1x1xf32>
      tpu.vector_store %arg4[%c0_23, %c0_24, %c0_25], %46 {strides = array<i32>} : memref<1x1x1xf32, #tpu.memory_space<vmem>>, vector<1x1x1xf32>,
      %cst_26 = arith.constant 0.000000e+00 : f32
      %47 = vector.broadcast %cst_26 : f32 to vector<1x1xf32>
      %c0_27 = arith.constant 0 : index
      %c0_28 = arith.constant 0 : index
      %c0_29 = arith.constant 0 : index
      %48 = vector.load %arg5[%c0_27, %c0_28, %c0_29] : memref<1x1x1xf32, #tpu.memory_space<vmem>>, vector<1x1x1xf32>
      %49 = vector.shape_cast %48 : vector<1x1x1xf32> to vector<1x1xf32>
      %50 = vector.shape_cast %47 : vector<1x1xf32> to vector<1x1x1xf32>
      tpu.vector_store %arg5[%c0_27, %c0_28, %c0_29], %50 {strides = array<i32>} : memref<1x1x1xf32, #tpu.memory_space<vmem>>, vector<1x1x1xf32>,
    } else {
    }
    %c0 = arith.constant 0 : index
    %c0_1 = arith.constant 0 : index
    %3 = vector.load %arg2[%c0, %c0_1] : memref<8x32xf32, #tpu.memory_space<vmem>>, vector<8x32xf32>
    %c0_2 = arith.constant 0 : index
    %c0_3 = arith.constant 0 : index
    %4 = vector.load %arg3[%c0_2, %c0_3] : memref<8x1xi32, #tpu.memory_space<vmem>>, vector<8x1xi32>
    %5 = tpu.iota {dimensions = array<i32: 1>} : vector<8x32xi32>
    %6 = vector.broadcast %4 : vector<8x1xi32> to vector<8x32xi32>
    %7 = arith.cmpi eq, %5, %6 : vector<8x32xi32>
    %cst = arith.constant 0.000000e+00 : f32
    %8 = vector.broadcast %cst : f32 to vector<8x32xf32>
    %9 = arith.select %7, %3, %8 : vector<8x32xi1>, vector<8x32xf32>
    %cst_4 = arith.constant dense<0.000000e+00> : vector<8xf32>
    %10 = vector.multi_reduction <add>, %9, %cst_4 [1] : vector<8x32xf32> to vector<8xf32>
    %11 = vector.shape_cast %10 : vector<8xf32> to vector<8x1xf32>
    %cst_5 = arith.constant dense<0xFF800000> : vector<8xf32>
    %12 = vector.multi_reduction <maximumf>, %3, %cst_5 [1] : vector<8x32xf32> to vector<8xf32>
    %13 = vector.shape_cast %12 : vector<8xf32> to vector<8x1xf32>
    %14 = vector.broadcast %13 : vector<8x1xf32> to vector<8x32xf32>
    %15 = arith.subf %3, %14 : vector<8x32xf32>
    %16 = math.exp %15 : vector<8x32xf32>
    %cst_6 = arith.constant dense<0.000000e+00> : vector<8xf32>
    %17 = vector.multi_reduction <add>, %16, %cst_6 [1] : vector<8x32xf32> to vector<8xf32>
    %18 = vector.shape_cast %17 : vector<8xf32> to vector<8x1xf32>
    %19 = math.log %18 : vector<8x1xf32>
    %20 = arith.addf %19, %13 : vector<8x1xf32>
    %21 = arith.subf %20, %11 : vector<8x1xf32>
    %c0_i32_7 = arith.constant 0 : i32
    %22 = vector.broadcast %c0_i32_7 : i32 to vector<8x1xi32>
    %23 = arith.cmpi ne, %4, %22 : vector<8x1xi32>
    %24 = arith.extui %23 : vector<8x1xi1> to vector<8x1xi32>
    %25 = arith.sitofp %24 : vector<8x1xi32> to vector<8x1xf32>
    %c0_8 = arith.constant 0 : index
    %c0_9 = arith.constant 0 : index
    %c0_10 = arith.constant 0 : index
    %26 = vector.load %arg4[%c0_8, %c0_9, %c0_10] : memref<1x1x1xf32, #tpu.memory_space<vmem>>, vector<1x1x1xf32>
    %27 = vector.shape_cast %26 : vector<1x1x1xf32> to vector<1x1xf32>
    %28 = arith.mulf %21, %25 : vector<8x1xf32>
    %cst_11 = arith.constant dense<0.000000e+00> : vector<1xf32>
    %29 = vector.multi_reduction <add>, %28, %cst_11 [0] : vector<8x1xf32> to vector<1xf32>
    %30 = vector.shape_cast %29 : vector<1xf32> to vector<1x1xf32>
    %31 = arith.addf %27, %30 : vector<1x1xf32>
    %c0_12 = arith.constant 0 : index
    %c0_13 = arith.constant 0 : index
    %c0_14 = arith.constant 0 : index
    %32 = vector.load %arg4[%c0_12, %c0_13, %c0_14] : memref<1x1x1xf32, #tpu.memory_space<vmem>>, vector<1x1x1xf32>
    %33 = vector.shape_cast %32 : vector<1x1x1xf32> to vector<1x1xf32>
    %34 = vector.shape_cast %31 : vector<1x1xf32> to vector<1x1x1xf32>
    tpu.vector_store %arg4[%c0_12, %c0_13, %c0_14], %34 {strides = array<i32>} : memref<1x1x1xf32, #tpu.memory_space<vmem>>, vector<1x1x1xf32>,
    %c0_15 = arith.constant 0 : index
    %c0_16 = arith.constant 0 : index
    %c0_17 = arith.constant 0 : index
    %35 = vector.load %arg5[%c0_15, %c0_16, %c0_17] : memref<1x1x1xf32, #tpu.memory_space<vmem>>, vector<1x1x1xf32>
    %36 = vector.shape_cast %35 : vector<1x1x1xf32> to vector<1x1xf32>
    %cst_18 = arith.constant dense<0.000000e+00> : vector<1xf32>
    %37 = vector.multi_reduction <add>, %25, %cst_18 [0] : vector<8x1xf32> to vector<1xf32>
    %38 = vector.shape_cast %37 : vector<1xf32> to vector<1x1xf32>
    %39 = arith.addf %36, %38 : vector<1x1xf32>
    %c0_19 = arith.constant 0 : index
    %c0_20 = arith.constant 0 : index
    %c0_21 = arith.constant 0 : index
    %40 = vector.load %arg5[%c0_19, %c0_20, %c0_21] : memref<1x1x1xf32, #tpu.memory_space<vmem>>, vector<1x1x1xf32>
    %41 = vector.shape_cast %40 : vector<1x1x1xf32> to vector<1x1xf32>
    %42 = vector.shape_cast %39 : vector<1x1xf32> to vector<1x1x1xf32>
    tpu.vector_store %arg5[%c0_19, %c0_20, %c0_21], %42 {strides = array<i32>} : memref<1x1x1xf32, #tpu.memory_space<vmem>>, vector<1x1x1xf32>,
    return
  }
  func.func @transform_0(%arg0: i32, %arg1: i32) -> (i32, i32) {
    %c1_i32 = arith.constant 1 : i32
    %0 = arith.muli %arg0, %c1_i32 : i32
    %1 = arith.addi %0, %arg1 : i32
    %c0_i32 = arith.constant 0 : i32
    %c0_i32_0 = arith.constant 0 : i32
    return %1, %c0_i32 : i32, i32
  }
  func.func @transform_1(%arg0: i32, %arg1: i32) -> (i32, i32) {
    %c1_i32 = arith.constant 1 : i32
    %0 = arith.muli %arg0, %c1_i32 : i32
    %1 = arith.addi %0, %arg1 : i32
    %c0_i32 = arith.constant 0 : i32
    %c0_i32_0 = arith.constant 0 : i32
    return %1, %c0_i32 : i32, i32
  }
  func.func @transform_2(%arg0: i32, %arg1: i32) -> (i32, i32, i32) {
    %c0_i32 = arith.constant 0 : i32
    %c0_i32_0 = arith.constant 0 : i32
    %c0_i32_1 = arith.constant 0 : i32
    return %arg0, %c0_i32, %c0_i32_0 : i32, i32, i32
  }
  func.func @transform_3(%arg0: i32, %arg1: i32) -> (i32, i32, i32) {
    %c0_i32 = arith.constant 0 : i32
    %c0_i32_0 = arith.constant 0 : i32
    %c0_i32_1 = arith.constant 0 : i32
    return %arg0, %c0_i32, %c0_i32_0 : i32, i32, i32
  }
}

</mosaic_0001>

<llo_original>
// kernel: tpu_custom_call.1
$region0: #{tpu_custom_call.1}
  #allocation0 [shape = 'u32[]', space=smem, size = 0x4, offset = 0x4, fixed_abs, tag = 'smem constant byte address 0x4 - core index']
  #allocation1 [shape = 'u32[144,128]{1,0:T(1,128)}', space=vmem, size = 0x12000, scoped, tag = 'internal scratch']
  %s0 = inlined_call_operand.vmem [shape: f32[16,32], index: 0, kind: input, shape index: {}]
  %s1 = inlined_call_operand.vmem [shape: s32[16,1], index: 1, kind: input, shape index: {}]
  %s2 = inlined_call_operand.vmem [shape: f32[2,1,1], index: 2, kind: output, shape index: {0}]
  %s3 = inlined_call_operand.vmem [shape: f32[2,1,1], index: 3, kind: output, shape index: {1}]
  %4 = xla_tuple %s2, %s3
  %s5 = sld [smem:[#allocation0]]
  $region53: #{tpu_custom_call.1} parent=0
    _
  %s7 = ssub.s32 1, %s5
  %s8 = scalar_select 0, %s7, %s5
  loop: start=0, step=1, limit=4
  $region2: #{tpu_custom_call.1} parent=0 // loop_pre_header
    _
  $region3: #{tpu_custom_call.1} parent=0 // loop_header
    %s10 = sphi 0, %s14
    %p11 = scmp.ge.s32.totalorder %s10, 4
    %s17 = sphi 0, %s29
    %s18 = sphi 0, %s25
    %s19 = sphi 0, %s17
    %s20 = sphi 0, %s18
    %s21 = sphi 0, %s19
    %s22 = sphi 0, %s20
    %s34 = sphi 0, %s36
    %s37 = sphi 0, %s34
    %s38 = sphi 0, %s37
    %s54 = sphi 0, %s38
    %s62 = sphi 0, %s64
    %s65 = sphi 0, %s62
    %s66 = sphi 0, %s65
    %s82 = sphi 0, %s66
    %s88 = sphi 0, %s90
    %s91 = sphi 0, %s88
    %s92 = sphi 0, %s91
    %s108 = sphi 0, %s92
    %s114 = sphi 0, %s116
    %s117 = sphi 0, %s114
    %s118 = sphi 0, %s117
    %s134 = sphi 0, %s118
  $region4: #{tpu_custom_call.1} parent=0 // loop_header_branch
    %13 = sbr.rel (%p11) target = $region8
  $region5: #{tpu_custom_call.1} parent=0 // loop_body
    %s15 = ssub.s32 %s10, 1
    %s16 = ssub.s32 %s10, 2
    %s23 = sadd.s32 1, %s18
    %p24 = scmp.ge.s32.totalorder %s23, 1
    %s25 = scalar_select %p24, 0, %s23
    %s26 = sadd.s32 1, %s17
    %s27 = scalar_select %p24, %s26, %s17
    %p28 = scmp.ge.s32.totalorder %s27, 2
    %s29 = scalar_select %p28, 0, %s27
    %s30 = sadd.s32 %s17, %s18
    %s31 = sadd.s32 %s29, %s25
    %s32 = ssub.s32 %s30, %s31
    %p33 = scmp.eq.s32.totalorder %s32, 0
    %s35 = sadd.s32 %s34, 1
    %s36 = scalar_select %p33, %s34, %s35
    %p39 = pneg %p33
    %p40 = scmp.eq.s32.totalorder %s10, 1
    %p41 = por %p39, %p40
    %p42 = scmp.ne.s32.totalorder %s34, %s37
    %p43 = scmp.eq.s32.totalorder %s10, 0
    %p44 = por %p42, %p43
    %p45 = scmp.ne.s32.totalorder %s34, %s37
    %p46 = scmp.eq.s32.totalorder %s15, 1
    %p47 = por %p45, %p46
    %p48 = scmp.ne.s32.totalorder %s37, %s38
    %p49 = scmp.eq.s32.totalorder %s15, 0
    %p50 = por %p48, %p49
    %p51 = scmp.ne.s32.totalorder %s37, %s38
    %p52 = scmp.eq.s32.totalorder %s16, 1
    %p53 = por %p51, %p52
    %p55 = scmp.ne.s32.totalorder %s38, %s54
    %p56 = scmp.eq.s32.totalorder %s16, 0
    %p57 = por %p55, %p56
    %s58 = sadd.s32 %s17, %s18
    %s59 = sadd.s32 %s29, %s25
    %s60 = ssub.s32 %s58, %s59
    %p61 = scmp.eq.s32.totalorder %s60, 0
    %s63 = sadd.s32 %s62, 1
    %s64 = scalar_select %p61, %s62, %s63
    %p67 = pneg %p61
    %p68 = scmp.eq.s32.totalorder %s10, 1
    %p69 = por %p67, %p68
    %p70 = scmp.ne.s32.totalorder %s62, %s65
    %p71 = scmp.eq.s32.totalorder %s10, 0
    %p72 = por %p70, %p71
    %p73 = scmp.ne.s32.totalorder %s62, %s65
    %p74 = scmp.eq.s32.totalorder %s15, 1
    %p75 = por %p73, %p74
    %p76 = scmp.ne.s32.totalorder %s65, %s66
    %p77 = scmp.eq.s32.totalorder %s15, 0
    %p78 = por %p76, %p77
    %p79 = scmp.ne.s32.totalorder %s65, %s66
    %p80 = scmp.eq.s32.totalorder %s16, 1
    %p81 = por %p79, %p80
    %p83 = scmp.ne.s32.totalorder %s66, %s82
    %p84 = scmp.eq.s32.totalorder %s16, 0
    %p85 = por %p83, %p84
    %s86 = ssub.s32 %s17, %s29
    %p87 = scmp.eq.s32.totalorder %s86, 0
    %s89 = sadd.s32 %s88, 1
    %s90 = scalar_select %p87, %s88, %s89
    %p93 = pneg %p87
    %p94 = scmp.eq.s32.totalorder %s10, 1
    %p95 = por %p93, %p94
    %p96 = scmp.ne.s32.totalorder %s88, %s91
    %p97 = scmp.eq.s32.totalorder %s10, 0
    %p98 = por %p96, %p97
    %p99 = scmp.ne.s32.totalorder %s88, %s91
    %p100 = scmp.eq.s32.totalorder %s15, 1
    %p101 = por %p99, %p100
    %p102 = scmp.ne.s32.totalorder %s91, %s92
    %p103 = scmp.eq.s32.totalorder %s15, 0
    %p104 = por %p102, %p103
    %p105 = scmp.ne.s32.totalorder %s91, %s92
    %p106 = scmp.eq.s32.totalorder %s16, 1
    %p107 = por %p105, %p106
    %p109 = scmp.ne.s32.totalorder %s92, %s108
    %p110 = scmp.eq.s32.totalorder %s16, 0
    %p111 = por %p109, %p110
    %s112 = ssub.s32 %s17, %s29
    %p113 = scmp.eq.s32.totalorder %s112, 0
    %s115 = sadd.s32 %s114, 1
    %s116 = scalar_select %p113, %s114, %s115
    %p119 = pneg %p113
    %p120 = scmp.eq.s32.totalorder %s10, 1
    %p121 = por %p119, %p120
    %p122 = scmp.ne.s32.totalorder %s114, %s117
    %p123 = scmp.eq.s32.totalorder %s10, 0
    %p124 = por %p122, %p123
    %p125 = scmp.ne.s32.totalorder %s114, %s117
    %p126 = scmp.eq.s32.totalorder %s15, 1
    %p127 = por %p125, %p126
    %p128 = scmp.ne.s32.totalorder %s117, %s118
    %p129 = scmp.eq.s32.totalorder %s15, 0
    %p130 = por %p128, %p129
    %p131 = scmp.ne.s32.totalorder %s117, %s118
    %p132 = scmp.eq.s32.totalorder %s16, 1
    %p133 = por %p131, %p132
    %p135 = scmp.ne.s32.totalorder %s118, %s134
    %p136 = scmp.eq.s32.totalorder %s16, 0
    %p137 = por %p135, %p136
    %p138 = scmp.le.s32.totalorder 1, %s10
    %p139 = scmp.lt.s32.totalorder %s10, 3
    %p140 = pnand %p138, %p139
    %p141 = pneg %p140
    // Predicated region
    $region9: #{tpu_custom_call.1} parent=5 // pred_check
      _
    $region10: #{tpu_custom_call.1} parent=5 // pred_check_branch
      %143 = sbr.rel (%p140) target = $region12
    $region11: #{tpu_custom_call.1} parent=5 // pred_region
      %s144 = ssub.s32 %s10, 1
    $region12: #{tpu_custom_call.1} parent=5 // pred_fallthru
      _
    %p145 = scmp.lt.s32.totalorder %s10, 2
    // Predicated region
    $region13: #{tpu_custom_call.1} parent=5 // pred_check
      %p146 = pneg %p145
    $region14: #{tpu_custom_call.1} parent=5 // pred_check_branch
      %148 = sbr.rel (%p146) target = $region16
    $region15: #{tpu_custom_call.1} parent=5 // pred_region
      // Predicated region
      $region17: #{tpu_custom_call.1} parent=15 // pred_check
        %p149 = pneg %p44
      $region18: #{tpu_custom_call.1} parent=15 // pred_check_branch
        %151 = sbr.rel (%p149) target = $region20
      $region19: #{tpu_custom_call.1} parent=15 // pred_region
        %s152 = sadd.s32 %s17, %s18
        %p153 = scmp.lt.s32.totalorder %s152, 1
        %s154 = scalar_select %p153, %s152, 1
        %s155 = smul.addr %s154, 8
        %s156 = scalar_lea.vmem %s0, %s155
        %s157 = sadd.s32 %s17, %s18
      $region20: #{tpu_custom_call.1} parent=15 // pred_fallthru
        _
      // Predicated region
      $region21: #{tpu_custom_call.1} parent=15 // pred_check
        %p158 = pneg %p72
      $region22: #{tpu_custom_call.1} parent=15 // pred_check_branch
        %160 = sbr.rel (%p158) target = $region24
      $region23: #{tpu_custom_call.1} parent=15 // pred_region
        %s161 = sadd.s32 %s17, %s18
        %p162 = scmp.lt.s32.totalorder %s161, 1
        %s163 = scalar_select %p162, %s161, 1
        %s164 = smul.addr %s163, 8
        %s165 = scalar_lea.vmem %s1, %s164
        %s166 = sadd.s32 %s17, %s18
      $region24: #{tpu_custom_call.1} parent=15 // pred_fallthru
        _
    $region16: #{tpu_custom_call.1} parent=5 // pred_fallthru
      _
    %p167 = scmp.le.s32.totalorder 1, %s10
    %p168 = scmp.lt.s32.totalorder %s10, 3
    %p169 = pnand %p167, %p168
    %p170 = pneg %p169
    // Predicated region
    $region25: #{tpu_custom_call.1} parent=5 // pred_check
      _
    $region26: #{tpu_custom_call.1} parent=5 // pred_check_branch
      %172 = sbr.rel (%p169) target = $region28
    $region27: #{tpu_custom_call.1} parent=5 // pred_region
      %s173 = ssub.s32 %s10, 1
      %s174 = sadd.s32 %s19, %s20
      %p175 = scmp.lt.s32.totalorder %s174, 1
      %s176 = scalar_select %p175, %s174, 1
      %s177 = smul.addr %s176, 8
      %s178 = scalar_lea.vmem %s0, %s177
      %p179 = pneg %p50
      %p180 = pneg %p47
      %s181 = sadd.s32 %s19, %s20
      %p182 = scmp.lt.s32.totalorder %s181, 1
      %s183 = scalar_select %p182, %s181, 1
      %s184 = smul.addr %s183, 8
      %s185 = scalar_lea.vmem %s1, %s184
      %p186 = pneg %p78
      %p187 = pneg %p75
      %p188 = pneg %p104
      %p189 = pneg %p101
      %p190 = scmp.lt.s32.totalorder %s19, 1
      %s191 = scalar_select %p190, %s19, 1
      %s192 = scalar_lea.vmem %s2, %s191
      %p193 = pneg %p130
      %p194 = pneg %p127
      %p195 = scmp.lt.s32.totalorder %s19, 1
      %s196 = scalar_select %p195, %s19, 1
      %s197 = scalar_lea.vmem %s3, %s196
      %s198 = sadd.s32 %s19, %s20
      %p199 = scmp.lt.s32.totalorder %s198, 1
      %s200 = scalar_select %p199, %s198, 1
      %s201 = smul.addr %s200, 8
      %s202 = scalar_lea.vmem %s0, %s201
      %s203 = sadd.s32 %s19, %s20
      %s204 = sadd.s32 %s19, %s20
      %p205 = scmp.lt.s32.totalorder %s204, 1
      %s206 = scalar_select %p205, %s204, 1
      %s207 = smul.addr %s206, 8
      %s208 = scalar_lea.vmem %s1, %s207
      %s209 = sadd.s32 %s19, %s20
      %p210 = scmp.lt.s32.totalorder %s19, 1
      %s211 = scalar_select %p210, %s19, 1
      %s212 = scalar_lea.vmem %s2, %s211
      %p213 = scmp.lt.s32.totalorder %s19, 1
      %s214 = scalar_select %p213, %s19, 1
      %s215 = scalar_lea.vmem %s3, %s214
      %p216 = scmp.eq.s32.totalorder %s20, 0
      // Predicated region
      $region29: #{tpu_custom_call.1} parent=27 // pred_check
        %p217 = pneg %p216
      $region30: #{tpu_custom_call.1} parent=27 // pred_check_branch
        %219 = sbr.rel (%p217) target = $region32
      $region31: #{tpu_custom_call.1} parent=27 // pred_region
        %vm220 = vcmask 0
        %221 = vst.msk [vmem:[%s212] sm:$0x1] %vm220, 0.0
        %222 = vst.msk [vmem:[%s215] sm:$0x1] %vm220, 0.0
      $region32: #{tpu_custom_call.1} parent=27 // pred_fallthru
        _
      %v223 = vld [vmem:[%s202] sm:$0xff]
      %v224 = vld [vmem:[%s208] sm:$0xff]
      %v225 = vlaneseq
      %v226 = vand.u32 %v225, 127
      %227 = vset.pattern.permute.xlu0 0
      %228 = vperm.xlu0 %227, %v224
      %v229 = vpop.permute.xlu0 %228
      %vm230 = vcmp.eq.s32.totalorder %v226, %v229
      %v231 = vsel %vm230, %v223, 0.0
      %vm232 = vcmask 261120
      %v233 = vsel %vm232, %v231, 0.0
      %234 = vadd.xlane.f32.xlu0 %v233
      %v235 = vpop.xlane.xlu0 %234
      %v236 = vsel %vm232, %v223, -inf
      %237 = vmax.xlane.f32.xlu0 %v236
      %v238 = vpop.xlane.xlu0 %237
      %v239 = vsub.f32 %v223, %v238
      %v240 = vmul.f32 %v239, 1.442695
      %v241 = vpow.pop %v240
      %v242 = vsel %vm232, %v241, 0.0
      %243 = vadd.xlane.f32.xlu0 %v242
      %v244 = vpop.xlane.xlu0 %243
      %v245 = vlog2.pop %v244
      %v246 = vmul.f32 %v245, 0.6931472
      %v247 = vadd.f32 %v246, %v238
      %v248 = vsub.f32 %v247, %v235
      %vm249 = vcmp.ne.s32.totalorder %v224, 0
      %v250 = vsel %vm249, 1, 0
      %v251 = vcvt.s32.f32 %v250
      %v252 = vld [vmem:[%s212] sm:$0x1]
      %v253 = vmul.f32 %v248, %v251
      %vm254 = vcmask 7168
      %v255 = vsel %vm254, %v253, 0.0
      %v256 = vrot.slane %v255, 4
      %v257 = vadd.f32 %v255, %v256
      %v258 = vrot.slane %v257, 2
      %v259 = vadd.f32 %v257, %v258
      %v260 = vrot.slane %v259, 1
      %v261 = vadd.f32 %v259, %v260
      %v262 = vadd.f32 %v252, %v261
      %vm263 = vcmask 0
      %264 = vst.msk [vmem:[%s212] sm:$0x1] %vm263, %v262
      %v265 = vld [vmem:[%s215] sm:$0x1]
      %v266 = vsel %vm254, %v251, 0.0
      %v267 = vrot.slane %v266, 4
      %v268 = vadd.f32 %v266, %v267
      %v269 = vrot.slane %v268, 2
      %v270 = vadd.f32 %v268, %v269
      %v271 = vrot.slane %v270, 1
      %v272 = vadd.f32 %v270, %v271
      %v273 = vadd.f32 %v265, %v272
      %274 = vst.msk [vmem:[%s215] sm:$0x1] %vm263, %v273
      %p275 = scmp.lt.s32.totalorder %s19, 1
      %s276 = scalar_select %p275, %s19, 1
      %s277 = scalar_lea.vmem %s2, %s276
      %p278 = scmp.lt.s32.totalorder %s19, 1
      %s279 = scalar_select %p278, %s19, 1
      %s280 = scalar_lea.vmem %s3, %s279
      // Predicated region
      $region33: #{tpu_custom_call.1} parent=27 // pred_check
        %p281 = pneg %p101
      $region34: #{tpu_custom_call.1} parent=27 // pred_check_branch
        %283 = sbr.rel (%p281) target = $region36
      $region35: #{tpu_custom_call.1} parent=27 // pred_region
        _
      $region36: #{tpu_custom_call.1} parent=27 // pred_fallthru
        _
      // Predicated region
      $region37: #{tpu_custom_call.1} parent=27 // pred_check
        %p284 = pneg %p127
      $region38: #{tpu_custom_call.1} parent=27 // pred_check_branch
        %286 = sbr.rel (%p284) target = $region40
      $region39: #{tpu_custom_call.1} parent=27 // pred_region
        _
      $region40: #{tpu_custom_call.1} parent=27 // pred_fallthru
        _
    $region28: #{tpu_custom_call.1} parent=5 // pred_fallthru
      _
    %p287 = scmp.le.s32.totalorder 2, %s10
    // Predicated region
    $region41: #{tpu_custom_call.1} parent=5 // pred_check
      %p288 = pneg %p287
    $region42: #{tpu_custom_call.1} parent=5 // pred_check_branch
      %290 = sbr.rel (%p288) target = $region44
    $region43: #{tpu_custom_call.1} parent=5 // pred_region
      %s291 = ssub.s32 %s10, 2
      // Predicated region
      $region45: #{tpu_custom_call.1} parent=43 // pred_check
        %p292 = pneg %p107
      $region46: #{tpu_custom_call.1} parent=43 // pred_check_branch
        %294 = sbr.rel (%p292) target = $region48
      $region47: #{tpu_custom_call.1} parent=43 // pred_region
        %p295 = scmp.lt.s32.totalorder %s21, 1
        %s296 = scalar_select %p295, %s21, 1
        %s297 = scalar_lea.vmem %s2, %s296
      $region48: #{tpu_custom_call.1} parent=43 // pred_fallthru
        _
      // Predicated region
      $region49: #{tpu_custom_call.1} parent=43 // pred_check
        %p298 = pneg %p133
      $region50: #{tpu_custom_call.1} parent=43 // pred_check_branch
        %300 = sbr.rel (%p298) target = $region52
      $region51: #{tpu_custom_call.1} parent=43 // pred_region
        %p301 = scmp.lt.s32.totalorder %s21, 1
        %s302 = scalar_select %p301, %s21, 1
        %s303 = scalar_lea.vmem %s3, %s302
      $region52: #{tpu_custom_call.1} parent=43 // pred_fallthru
        _
    $region44: #{tpu_custom_call.1} parent=5 // pred_fallthru
      _
  $region6: #{tpu_custom_call.1} parent=0 // loop_footer
    %s14 = sadd.s32 1, %s10
  $region7: #{tpu_custom_call.1} parent=0 // loop_footer_branch
    %9 = sbr.rel target = $region3
  $region8: #{tpu_custom_call.1} parent=0 // loop_exit
    _

</llo_original>
